<compile_context>
chip_gen: v6e
topology: v6e:2x2x1
jax: 0.10.0
libtpu: 0.0.40
codegen_flags: <defaults>
</compile_context>

<pallas_src>
import jax
import jax.numpy as jnp
from jax.experimental import pallas as pl
from jax.experimental.pallas import tpu as pltpu


def _round_up(x, m):
    return (x + m - 1) // m * m


def _make_kernel(dot_dtype):
    def kernel(s_ref, a_ref, w1s_ref, w1a_ref, b1_ref, w2_ref, b2_ref,
               w3r_ref, b3_ref, out_ref):
        def dot(lhs, rhs):
            return jnp.dot(lhs.astype(dot_dtype), rhs.astype(dot_dtype),
                           preferred_element_type=jnp.float32)

        # fc1: split matmul replaces cat([s, a], -1) @ W1 (no HBM x).
        h1 = (dot(s_ref[...], w1s_ref[...])
              + dot(a_ref[...], w1a_ref[...])
              + b1_ref[...])
        h1 = jnp.maximum(h1, 0.0)

        # fc2
        h2 = dot(h1, w2_ref[...]) + b2_ref[...]
        h2 = jnp.maximum(h2, 0.0)

        # fc3 (N=1): VPU multiply + lane reduce instead of a 1-column MXU
        # matmul; scalar bias comes from SMEM.
        q = jnp.sum(h2 * w3r_ref[...], axis=-1, keepdims=True) + b3_ref[0, 0]
        out_ref[...] = q.astype(out_ref.dtype)

    return kernel


def critic_forward(s, a, params, state_dim, action_dim, *,
                   block_b=512, dot_dtype=jnp.float32):
    """Q(s, a) for the SAC critic. Returns (B, 1) float32."""
    w1, b1, w2, b2, w3, b3 = params

    s = s.reshape(-1, state_dim).astype(jnp.float32)
    a = a.reshape(-1, action_dim).astype(jnp.float32)
    B = s.shape[0]

    # Batch tiling: TB rows per grid step; pad batch to a multiple of TB
    # (padded rows are computed on garbage-free zero inputs and sliced off).
    TB = min(block_b, _round_up(B, 8))
    B_pad = _round_up(B, TB)
    if B_pad != B:
        s = jnp.pad(s, ((0, B_pad - B), (0, 0)))
        a = jnp.pad(a, ((0, B_pad - B), (0, 0)))

    hidden = w1.shape[1]
    w1s = w1[:state_dim]          # (state_dim, hidden)
    w1a = w1[state_dim:]          # (action_dim, hidden)
    w3r = w3.T                    # (1, hidden) row for the VPU reduction
    b3s = b3.reshape(1, 1)        # scalar -> SMEM

    def row_spec(feat):
        return pl.BlockSpec((TB, feat), lambda i: (i, 0))

    def resident(shape):
        return pl.BlockSpec(shape, lambda i: (0, 0))

    out = pl.pallas_call(
        _make_kernel(dot_dtype),
        out_shape=jax.ShapeDtypeStruct((B_pad, 1), jnp.float32),
        grid=(B_pad // TB,),
        in_specs=[
            row_spec(state_dim),                           # s tile   (TB, Ds)
            row_spec(action_dim),                          # a tile   (TB, Da)
            resident((state_dim, hidden)),                 # W1[:Ds]  (VMEM-resident)
            resident((action_dim, hidden)),                # W1[Ds:]
            resident((1, hidden)),                         # b1
            resident((hidden, hidden)),                    # W2
            resident((1, hidden)),                         # b2
            resident((1, hidden)),                         # w3 row
            pl.BlockSpec(memory_space=pltpu.MemorySpace.SMEM),  # b3 scalar
        ],
        out_specs=pl.BlockSpec((TB, 1), lambda i: (i, 0)),
        compiler_params=pltpu.CompilerParams(
            dimension_semantics=("parallel",),
        ),
    )(s, a, w1s, w1a, b1, w2, b2, w3r, b3s)

    return out[:B]


def init_params(key, state_dim, action_dim, hidden=128):
    """Deterministic init matching nn.Linear default: U(-1/sqrt(fan_in), 1/sqrt(fan_in))."""
    def linear(key, fan_in, fan_out):
        kw, kb = jax.random.split(key)
        bound = 1.0 / jnp.sqrt(fan_in)
        w = jax.random.uniform(kw, (fan_in, fan_out), jnp.float32, -bound, bound)
        b = jax.random.uniform(kb, (1, fan_out), jnp.float32, -bound, bound)
        return w, b

    k1, k2, k3 = jax.random.split(key, 3)
    w1, b1 = linear(k1, state_dim + action_dim, hidden)
    w2, b2 = linear(k2, hidden, hidden)
    w3, b3 = linear(k3, hidden, 1)
    return (w1, b1, w2, b2, w3, b3)


if __name__ == "__main__":
    # Small shapes consistent with a Pendulum-style SAC critic.
    state_dim, action_dim, batch = 3, 1, 8

    key = jax.random.PRNGKey(0)
    ks, ka, kp = jax.random.split(key, 3)

    s = jax.random.normal(ks, (batch, state_dim), jnp.float32)
    a = jax.random.normal(ka, (batch, action_dim), jnp.float32)
    params = init_params(kp, state_dim, action_dim)

    def reference(s_, a_):
        w1, b1, w2, b2, w3, b3 = params
        x = jnp.concatenate([s_.reshape(-1, state_dim),
                             a_.reshape(-1, action_dim)], -1)
        h = jnp.maximum(x @ w1 + b1, 0.0)
        h = jnp.maximum(h @ w2 + b2, 0.0)
        return h @ w3 + b3

    # f32 path (default)
    q = critic_forward(s, a, params, state_dim, action_dim)
    jax.block_until_ready(q)
    ref = reference(s, a)
    assert q.shape == (batch, 1)
    assert jnp.allclose(q, ref, atol=1e-5, rtol=1e-5)

    # Batch that is not a multiple of the tile (exercises wrapper-side padding).
    batch2 = 10
    s2 = jax.random.normal(jax.random.PRNGKey(1), (batch2, state_dim), jnp.float32)
    a2 = jax.random.normal(jax.random.PRNGKey(2), (batch2, action_dim), jnp.float32)
    q2 = critic_forward(s2, a2, params, state_dim, action_dim)
    jax.block_until_ready(q2)
    assert q2.shape == (batch2, 1)
    assert jnp.allclose(q2, reference(s2, a2), atol=1e-5, rtol=1e-5)

    # bf16 dot operands (mem-bound large-B option for v5e / v7x), f32 accumulate.
    q_bf16 = critic_forward(s, a, params, state_dim, action_dim,
                            dot_dtype=jnp.bfloat16)
    jax.block_until_ready(q_bf16)
    assert q_bf16.shape == (batch, 1)
    assert jnp.allclose(q_bf16, ref, atol=5e-2, rtol=5e-2)

    print("KERNEL_OK")
</pallas_src>

<mosaic_0001>
module attributes {stable_mosaic.version = 11 : i64} {
  func.func @kernel(%arg0: i32, %arg1: memref<8x3xf32, #tpu.memory_space<vmem>>, %arg2: memref<8x1xf32, #tpu.memory_space<vmem>>, %arg3: memref<3x128xf32, #tpu.memory_space<vmem>>, %arg4: memref<1x128xf32, #tpu.memory_space<vmem>>, %arg5: memref<1x128xf32, #tpu.memory_space<vmem>>, %arg6: memref<128x128xf32, #tpu.memory_space<vmem>>, %arg7: memref<1x128xf32, #tpu.memory_space<vmem>>, %arg8: memref<1x128xf32, #tpu.memory_space<vmem>>, %arg9: memref<1x1xf32, #tpu.memory_space<smem>>, %arg10: memref<8x1xf32, #tpu.memory_space<vmem>>) attributes {dimension_semantics = [#tpu.dimension_semantics<parallel>], iteration_bounds = array<i64: 1>, scalar_prefetch = 0 : i64, scratch_operands = 0 : i64, tpu.core_type = #tpu.core_type<tc>, window_params = [{transform_indices = @transform_0, window_bounds = array<i64: 8, 3>}, {transform_indices = @transform_1, window_bounds = array<i64: 8, 1>}, {pipeline_mode = #tpu.pipeline_mode<synchronous>, transform_indices = @transform_2, window_bounds = array<i64: 3, 128>}, {pipeline_mode = #tpu.pipeline_mode<synchronous>, transform_indices = @transform_3, window_bounds = array<i64: 1, 128>}, {pipeline_mode = #tpu.pipeline_mode<synchronous>, transform_indices = @transform_4, window_bounds = array<i64: 1, 128>}, {pipeline_mode = #tpu.pipeline_mode<synchronous>, transform_indices = @transform_5, window_bounds = array<i64: 128, 128>}, {pipeline_mode = #tpu.pipeline_mode<synchronous>, transform_indices = @transform_6, window_bounds = array<i64: 1, 128>}, {pipeline_mode = #tpu.pipeline_mode<synchronous>, transform_indices = @transform_7, window_bounds = array<i64: 1, 128>}, {transform_indices = @transform_8, window_bounds = array<i64: 1, 1>}, {transform_indices = @transform_9, window_bounds = array<i64: 8, 1>}]} {
    %c0 = arith.constant 0 : index
    %c0_0 = arith.constant 0 : index
    %0 = vector.load %arg1[%c0, %c0_0] : memref<8x3xf32, #tpu.memory_space<vmem>>, vector<8x3xf32>
    %c0_1 = arith.constant 0 : index
    %c0_2 = arith.constant 0 : index
    %1 = vector.load %arg3[%c0_1, %c0_2] : memref<3x128xf32, #tpu.memory_space<vmem>>, vector<3x128xf32>
    %cst = arith.constant dense<0.000000e+00> : vector<8x128xf32>
    %2 = tpu.matmul %0, %1, %cst {dimension_numbers = #tpu.dot_dimension_numbers<[1], [0], [0], [1], [0, 0, 1, 1], [], []>} : vector<8x3xf32>, vector<3x128xf32>, vector<8x128xf32> -> vector<8x128xf32>
    %c0_3 = arith.constant 0 : index
    %c0_4 = arith.constant 0 : index
    %3 = vector.load %arg2[%c0_3, %c0_4] : memref<8x1xf32, #tpu.memory_space<vmem>>, vector<8x1xf32>
    %c0_5 = arith.constant 0 : index
    %c0_6 = arith.constant 0 : index
    %4 = vector.load %arg4[%c0_5, %c0_6] : memref<1x128xf32, #tpu.memory_space<vmem>>, vector<1x128xf32>
    %cst_7 = arith.constant dense<0.000000e+00> : vector<8x128xf32>
    %5 = tpu.matmul %3, %4, %cst_7 {dimension_numbers = #tpu.dot_dimension_numbers<[1], [0], [0], [1], [0, 0, 1, 1], [], []>} : vector<8x1xf32>, vector<1x128xf32>, vector<8x128xf32> -> vector<8x128xf32>
    %6 = arith.addf %2, %5 : vector<8x128xf32>
    %c0_8 = arith.constant 0 : index
    %c0_9 = arith.constant 0 : index
    %7 = vector.load %arg5[%c0_8, %c0_9] : memref<1x128xf32, #tpu.memory_space<vmem>>, vector<1x128xf32>
    %8 = vector.broadcast %7 : vector<1x128xf32> to vector<8x128xf32>
    %9 = arith.addf %6, %8 : vector<8x128xf32>
    %cst_10 = arith.constant 0.000000e+00 : f32
    %10 = vector.broadcast %cst_10 : f32 to vector<8x128xf32>
    %11 = arith.maximumf %9, %10 : vector<8x128xf32>
    %c0_11 = arith.constant 0 : index
    %c0_12 = arith.constant 0 : index
    %12 = vector.load %arg6[%c0_11, %c0_12] : memref<128x128xf32, #tpu.memory_space<vmem>>, vector<128x128xf32>
    %cst_13 = arith.constant dense<0.000000e+00> : vector<8x128xf32>
    %13 = tpu.matmul %11, %12, %cst_13 {dimension_numbers = #tpu.dot_dimension_numbers<[1], [0], [0], [1], [0, 0, 1, 1], [], []>} : vector<8x128xf32>, vector<128x128xf32>, vector<8x128xf32> -> vector<8x128xf32>
    %c0_14 = arith.constant 0 : index
    %c0_15 = arith.constant 0 : index
    %14 = vector.load %arg7[%c0_14, %c0_15] : memref<1x128xf32, #tpu.memory_space<vmem>>, vector<1x128xf32>
    %15 = vector.broadcast %14 : vector<1x128xf32> to vector<8x128xf32>
    %16 = arith.addf %13, %15 : vector<8x128xf32>
    %cst_16 = arith.constant 0.000000e+00 : f32
    %17 = vector.broadcast %cst_16 : f32 to vector<8x128xf32>
    %18 = arith.maximumf %16, %17 : vector<8x128xf32>
    %c0_17 = arith.constant 0 : index
    %c0_18 = arith.constant 0 : index
    %19 = vector.load %arg8[%c0_17, %c0_18] : memref<1x128xf32, #tpu.memory_space<vmem>>, vector<1x128xf32>
    %20 = vector.broadcast %19 : vector<1x128xf32> to vector<8x128xf32>
    %21 = arith.mulf %18, %20 : vector<8x128xf32>
    %cst_19 = arith.constant dense<0.000000e+00> : vector<8xf32>
    %22 = vector.multi_reduction <add>, %21, %cst_19 [1] : vector<8x128xf32> to vector<8xf32>
    %23 = vector.shape_cast %22 : vector<8xf32> to vector<8x1xf32>
    %c0_20 = arith.constant 0 : index
    %c0_21 = arith.constant 0 : index
    %24 = memref.load %arg9[%c0_20, %c0_21] : memref<1x1xf32, #tpu.memory_space<smem>>
    %25 = vector.broadcast %24 : f32 to vector<8x1xf32>
    %26 = arith.addf %23, %25 : vector<8x1xf32>
    %c0_22 = arith.constant 0 : index
    %c0_23 = arith.constant 0 : index
    %27 = vector.load %arg10[%c0_22, %c0_23] : memref<8x1xf32, #tpu.memory_space<vmem>>, vector<8x1xf32>
    tpu.vector_store %arg10[%c0_22, %c0_23], %26 {strides = array<i32>} : memref<8x1xf32, #tpu.memory_space<vmem>>, vector<8x1xf32>,
    return
  }
  func.func @transform_0(%arg0: i32) -> (i32, i32) {
    %c0_i32 = arith.constant 0 : i32
    %c0_i32_0 = arith.constant 0 : i32
    return %arg0, %c0_i32 : i32, i32
  }
  func.func @transform_1(%arg0: i32) -> (i32, i32) {
    %c0_i32 = arith.constant 0 : i32
    %c0_i32_0 = arith.constant 0 : i32
    return %arg0, %c0_i32 : i32, i32
  }
  func.func @transform_2(%arg0: i32) -> (i32, i32) {
    %c0_i32 = arith.constant 0 : i32
    %c0_i32_0 = arith.constant 0 : i32
    %c0_i32_1 = arith.constant 0 : i32
    return %c0_i32, %c0_i32_0 : i32, i32
  }
  func.func @transform_3(%arg0: i32) -> (i32, i32) {
    %c0_i32 = arith.constant 0 : i32
    %c0_i32_0 = arith.constant 0 : i32
    %c0_i32_1 = arith.constant 0 : i32
    return %c0_i32, %c0_i32_0 : i32, i32
  }
  func.func @transform_4(%arg0: i32) -> (i32, i32) {
    %c0_i32 = arith.constant 0 : i32
    %c0_i32_0 = arith.constant 0 : i32
    %c0_i32_1 = arith.constant 0 : i32
    return %c0_i32, %c0_i32_0 : i32, i32
  }
  func.func @transform_5(%arg0: i32) -> (i32, i32) {
    %c0_i32 = arith.constant 0 : i32
    %c0_i32_0 = arith.constant 0 : i32
    %c0_i32_1 = arith.constant 0 : i32
    return %c0_i32, %c0_i32_0 : i32, i32
  }
  func.func @transform_6(%arg0: i32) -> (i32, i32) {
    %c0_i32 = arith.constant 0 : i32
    %c0_i32_0 = arith.constant 0 : i32
    %c0_i32_1 = arith.constant 0 : i32
    return %c0_i32, %c0_i32_0 : i32, i32
  }
  func.func @transform_7(%arg0: i32) -> (i32, i32) {
    %c0_i32 = arith.constant 0 : i32
    %c0_i32_0 = arith.constant 0 : i32
    %c0_i32_1 = arith.constant 0 : i32
    return %c0_i32, %c0_i32_0 : i32, i32
  }
  func.func @transform_8(%arg0: i32) -> (i32, i32) {
    %c0_i32 = arith.constant 0 : i32
    %c0_i32_0 = arith.constant 0 : i32
    %c0_i32_1 = arith.constant 0 : i32
    return %c0_i32, %c0_i32_0 : i32, i32
  }
  func.func @transform_9(%arg0: i32) -> (i32, i32) {
    %c0_i32 = arith.constant 0 : i32
    %c0_i32_0 = arith.constant 0 : i32
    return %arg0, %c0_i32 : i32, i32
  }
}

</mosaic_0001>

<llo_original>
// kernel: tpu_custom_call.1
$region0: #{tpu_custom_call.1}
  #allocation0 [shape = 'u32[]', space=smem, size = 0x4, offset = 0x4, fixed_abs, tag = 'smem constant byte address 0x4 - core index']
  #allocation1 [shape = 'u32[144,128]{1,0:T(1,128)}', space=vmem, size = 0x12000, scoped, tag = 'internal scratch']
  #allocation2 [shape = 'f32[1,1]{1,0:T(1,128)S(6)}', space=smem, size = 0x200, scoped, tag = 'scoped memory for tpu_custom_call.1']
  %s0 = inlined_call_operand.vmem [shape: f32[8,3], index: 0, kind: input, shape index: {}]
  %s1 = inlined_call_operand.vmem [shape: f32[8,1], index: 1, kind: input, shape index: {}]
  %s2 = inlined_call_operand.vmem [shape: f32[3,128], index: 2, kind: input, shape index: {}]
  %s3 = inlined_call_operand.vmem [shape: f32[1,128], index: 3, kind: input, shape index: {}]
  %s4 = inlined_call_operand.vmem [shape: f32[1,128], index: 4, kind: input, shape index: {}]
  %s5 = inlined_call_operand.hbm [shape: f32[128,128], index: 5, kind: input, shape index: {}]
  %s6 = inlined_call_operand.vmem [shape: f32[1,128], index: 6, kind: input, shape index: {}]
  %s7 = inlined_call_operand.vmem [shape: f32[1,128], index: 7, kind: input, shape index: {}]
  %s8 = inlined_call_operand.<no memory space> [shape: f32[1,1], index: 8, kind: input, shape index: {}]
  %s9 = inlined_call_operand.vmem [shape: f32[8,1], index: 9, kind: output, shape index: {}]
  %s10 = sld [smem:[#allocation0]]
  $region50: #{tpu_custom_call.1} parent=0
    _
  %s12 = ssub.s32 1, %s10
  %s13 = scalar_select 0, %s12, %s10
  %14 = sst [smem:[#allocation2]] %s8
  $region1: #{tpu_custom_call.1} parent=0
    #allocation3 [shape = 'u8[65536]{0}', space=vmem, size = 0x10000, scoped, tag = 'input window, operand 5, single buffered']
    #allocation4 [shape = 's32[1]{0}', space=sflag, size = 0x4, scoped, tag = 'scoped memory for tpu_custom_call.1']
    %15 = vsyncpa [#allocation4], 0
    // Predicated region
    $region2: #{tpu_custom_call.1} parent=1 // pred_check
      _
    $region3: #{tpu_custom_call.1} parent=1 // pred_check_branch
      %17 = sbr.rel (0) target = $region5
    $region4: #{tpu_custom_call.1} parent=1 // pred_region
      _
    $region5: #{tpu_custom_call.1} parent=1 // pred_fallthru
      _
    // Predicated region
    $region6: #{tpu_custom_call.1} parent=1 // pred_check
      _
    $region7: #{tpu_custom_call.1} parent=1 // pred_check_branch
      %19 = sbr.rel (0) target = $region9
    $region8: #{tpu_custom_call.1} parent=1 // pred_region
      _
    $region9: #{tpu_custom_call.1} parent=1 // pred_fallthru
      _
    // Predicated region
    $region10: #{tpu_custom_call.1} parent=1 // pred_check
      _
    $region11: #{tpu_custom_call.1} parent=1 // pred_check_branch
      %21 = sbr.rel (0) target = $region13
    $region12: #{tpu_custom_call.1} parent=1 // pred_region
      _
    $region13: #{tpu_custom_call.1} parent=1 // pred_fallthru
      _
    // Predicated region
    $region14: #{tpu_custom_call.1} parent=1 // pred_check
      _
    $region15: #{tpu_custom_call.1} parent=1 // pred_check_branch
      %23 = sbr.rel (0) target = $region17
    $region16: #{tpu_custom_call.1} parent=1 // pred_region
      _
    $region17: #{tpu_custom_call.1} parent=1 // pred_fallthru
      _
    // Predicated region
    $region18: #{tpu_custom_call.1} parent=1 // pred_check
      _
    $region19: #{tpu_custom_call.1} parent=1 // pred_check_branch
      %25 = sbr.rel (0) target = $region21
    $region20: #{tpu_custom_call.1} parent=1 // pred_region
      _
    $region21: #{tpu_custom_call.1} parent=1 // pred_fallthru
      _
    // Predicated region
    $region22: #{tpu_custom_call.1} parent=1 // pred_check
      _
    $region23: #{tpu_custom_call.1} parent=1 // pred_check_branch
      %27 = sbr.rel (0) target = $region25
    $region24: #{tpu_custom_call.1} parent=1 // pred_region
      %s29 = ssub.s32 2048, 2048
      %30 = vsyncadd [#allocation4], %s29
      %s31 = sshll.u32 [#allocation3], 4
      %s32 = int_to_ptr.vmem [resolvable:$true] %s31
      %37 = dma.hbm_to_vmem [thread:$0]  %s5, 2048, %s32, [#allocation4], 128, 128, 8
    $region25: #{tpu_custom_call.1} parent=1 // pred_fallthru
      _
    // Predicated region
    $region26: #{tpu_custom_call.1} parent=1 // pred_check
      _
    $region27: #{tpu_custom_call.1} parent=1 // pred_check_branch
      %39 = sbr.rel (0) target = $region29
    $region28: #{tpu_custom_call.1} parent=1 // pred_region
      _
    $region29: #{tpu_custom_call.1} parent=1 // pred_fallthru
      _
    // Predicated region
    $region30: #{tpu_custom_call.1} parent=1 // pred_check
      _
    $region31: #{tpu_custom_call.1} parent=1 // pred_check_branch
      %41 = sbr.rel (0) target = $region33
    $region32: #{tpu_custom_call.1} parent=1 // pred_region
      _
    $region33: #{tpu_custom_call.1} parent=1 // pred_fallthru
      _
    // Predicated region
    $region34: #{tpu_custom_call.1} parent=1 // pred_check
      _
    $region35: #{tpu_custom_call.1} parent=1 // pred_check_branch
      %43 = sbr.rel (0) target = $region37
    $region36: #{tpu_custom_call.1} parent=1 // pred_region
      _
    $region37: #{tpu_custom_call.1} parent=1 // pred_fallthru
      _
    // Predicated region
    $region38: #{tpu_custom_call.1} parent=1 // pred_check
      _
    $region39: #{tpu_custom_call.1} parent=1 // pred_check_branch
      %45 = sbr.rel (0) target = $region41
    $region40: #{tpu_custom_call.1} parent=1 // pred_region
      %46 = dma.done [#allocation4], 2048
    $region41: #{tpu_custom_call.1} parent=1 // pred_fallthru
      _
    %v47 = vld [vmem:[%s0] sm:$0xff]
    %v48 = vld [vmem:[%s2] sm:$0x7]
    %v49 = vld [vmem:[%s1] sm:$0xff]
    %v50 = vld [vmem:[%s3] sm:$0x1]
    %vm51 = vcmask 7168
    %v53 = vsel %vm51, %v49, 0
    %vm55 = vcmask 1040384
    %v57 = vsel %vm55, %v50, 0
    %59 = vmatprep.subr.mxu0 0.0
    %60 = vmatpush1.msra.mxu0 0.0
    %61 = vmatprep.subr.mxu0 0.0
    %62 = vmatpush1.msra.mxu0 0.0
    %63 = vmatprep.subr.mxu0 0.0
    %64 = vmatpush1.msra.mxu0 0.0
    %65 = vmatprep.subr.mxu0 0.0
    %66 = vmatpush1.msra.mxu0 0.0
    %67 = vmatprep.subr.mxu0 0.0
    %68 = vmatpush1.msra.mxu0 0.0
    %69 = vmatprep.subr.mxu0 0.0
    %70 = vmatpush1.msra.mxu0 0.0
    %71 = vmatprep.subr.mxu0 0.0
    %72 = vmatpush1.msra.mxu0 0.0
    %73 = vmatprep.subr.mxu0 0.0
    %74 = vmatpush1.msra.mxu0 0.0
    %75 = vmatprep.subr.mxu0 0.0
    %76 = vmatpush1.msra.mxu0 0.0
    %77 = vmatprep.subr.mxu0 0.0
    %78 = vmatpush1.msra.mxu0 0.0
    %79 = vmatprep.subr.mxu0 0.0
    %80 = vmatpush1.msra.mxu0 0.0
    %81 = vmatprep.subr.mxu0 0.0
    %82 = vmatpush1.msra.mxu0 0.0
    %83 = vmatprep.subr.mxu0 0.0
    %84 = vmatpush1.msra.mxu0 0.0
    %85 = vmatprep.subr.mxu0 0.0
    %86 = vmatpush1.msra.mxu0 0.0
    %87 = vmatprep.subr.mxu0 0.0
    %88 = vmatpush1.msra.mxu0 0.0
    %89 = vmatprep.subr.mxu0 0.0
    %90 = vmatpush1.msra.mxu0 %v57
    %91 = vmatprep.subr.mxu0 0.0
    %92 = vmatpush2.msra.mxu0 0.0
    %93 = vmatprep.subr.mxu0 0.0
    %94 = vmatpush2.msra.mxu0 0.0
    %95 = vmatprep.subr.mxu0 0.0
    %96 = vmatpush2.msra.mxu0 0.0
    %97 = vmatprep.subr.mxu0 0.0
    %98 = vmatpush2.msra.mxu0 0.0
    %99 = vmatprep.subr.mxu0 0.0
    %100 = vmatpush2.msra.mxu0 0.0
    %101 = vmatprep.subr.mxu0 0.0
    %102 = vmatpush2.msra.mxu0 0.0
    %103 = vmatprep.subr.mxu0 0.0
    %104 = vmatpush2.msra.mxu0 0.0
    %105 = vmatprep.subr.mxu0 0.0
    %106 = vmatpush2.msra.mxu0 0.0
    %107 = vmatprep.subr.mxu0 0.0
    %108 = vmatpush2.msra.mxu0 0.0
    %109 = vmatprep.subr.mxu0 0.0
    %110 = vmatpush2.msra.mxu0 0.0
    %111 = vmatprep.subr.mxu0 0.0
    %112 = vmatpush2.msra.mxu0 0.0
    %113 = vmatprep.subr.mxu0 0.0
    %114 = vmatpush2.msra.mxu0 0.0
    %115 = vmatprep.subr.mxu0 0.0
    %116 = vmatpush2.msra.mxu0 0.0
    %117 = vmatprep.subr.mxu0 0.0
    %118 = vmatpush2.msra.mxu0 0.0
    %119 = vmatprep.subr.mxu0 0.0
    %120 = vmatpush2.msra.mxu0 0.0
    %121 = vmatprep.subr.mxu0 0.0
    %122 = vmatpush2.msra.mxu0 0.0
    %123 = vmatprep.mubr.f32.mxu0 0.0
    %124 = vmatmul.mubr.f32.gmra.mxu0 %v53
    %v125 = vpop.f32.mrf.mxu0
    %v126 = vadd.f32 0.0, %v125
    %v127 = vpop.f32.mrf.mxu0
    %128 = vdwg.mxu0
    %vm129 = vcmask 23552
    %v131 = vsel %vm129, %v47, 0
    %vm133 = vcmask 1042432
    %v135 = vsel %vm133, %v48, 0
    %137 = vmatprep.subr.mxu0 0.0
    %138 = vmatpush1.msra.mxu0 0.0
    %139 = vmatprep.subr.mxu0 0.0
    %140 = vmatpush1.msra.mxu0 0.0
    %141 = vmatprep.subr.mxu0 0.0
    %142 = vmatpush1.msra.mxu0 0.0
    %143 = vmatprep.subr.mxu0 0.0
    %144 = vmatpush1.msra.mxu0 0.0
    %145 = vmatprep.subr.mxu0 0.0
    %146 = vmatpush1.msra.mxu0 0.0
    %147 = vmatprep.subr.mxu0 0.0
    %148 = vmatpush1.msra.mxu0 0.0
    %149 = vmatprep.subr.mxu0 0.0
    %150 = vmatpush1.msra.mxu0 0.0
    %151 = vmatprep.subr.mxu0 0.0
    %152 = vmatpush1.msra.mxu0 0.0
    %153 = vmatprep.subr.mxu0 0.0
    %154 = vmatpush1.msra.mxu0 0.0
    %155 = vmatprep.subr.mxu0 0.0
    %156 = vmatpush1.msra.mxu0 0.0
    %157 = vmatprep.subr.mxu0 0.0
    %158 = vmatpush1.msra.mxu0 0.0
    %159 = vmatprep.subr.mxu0 0.0
    %160 = vmatpush1.msra.mxu0 0.0
    %161 = vmatprep.subr.mxu0 0.0
    %162 = vmatpush1.msra.mxu0 0.0
    %163 = vmatprep.subr.mxu0 0.0
    %164 = vmatpush1.msra.mxu0 0.0
    %165 = vmatprep.subr.mxu0 0.0
    %166 = vmatpush1.msra.mxu0 0.0
    %167 = vmatprep.subr.mxu0 0.0
    %168 = vmatpush1.msra.mxu0 %v135
    %169 = vmatprep.subr.mxu0 0.0
    %170 = vmatpush2.msra.mxu0 0.0
    %171 = vmatprep.subr.mxu0 0.0
    %172 = vmatpush2.msra.mxu0 0.0
    %173 = vmatprep.subr.mxu0 0.0
    %174 = vmatpush2.msra.mxu0 0.0
    %175 = vmatprep.subr.mxu0 0.0
    %176 = vmatpush2.msra.mxu0 0.0
    %177 = vmatprep.subr.mxu0 0.0
    %178 = vmatpush2.msra.mxu0 0.0
    %179 = vmatprep.subr.mxu0 0.0
    %180 = vmatpush2.msra.mxu0 0.0
    %181 = vmatprep.subr.mxu0 0.0
    %182 = vmatpush2.msra.mxu0 0.0
    %183 = vmatprep.subr.mxu0 0.0
    %184 = vmatpush2.msra.mxu0 0.0
    %185 = vmatprep.subr.mxu0 0.0
    %186 = vmatpush2.msra.mxu0 0.0
    %187 = vmatprep.subr.mxu0 0.0
    %188 = vmatpush2.msra.mxu0 0.0
    %189 = vmatprep.subr.mxu0 0.0
    %190 = vmatpush2.msra.mxu0 0.0
    %191 = vmatprep.subr.mxu0 0.0
    %192 = vmatpush2.msra.mxu0 0.0
    %193 = vmatprep.subr.mxu0 0.0
    %194 = vmatpush2.msra.mxu0 0.0
    %195 = vmatprep.subr.mxu0 0.0
    %196 = vmatpush2.msra.mxu0 0.0
    %197 = vmatprep.subr.mxu0 0.0
    %198 = vmatpush2.msra.mxu0 0.0
    %199 = vmatprep.subr.mxu0 0.0
    %200 = vmatpush2.msra.mxu0 0.0
    %201 = vmatprep.mubr.f32.mxu0 0.0
    %202 = vmatmul.mubr.f32.gmra.mxu0 %v131
    %v203 = vpop.f32.mrf.mxu0
    %v204 = vadd.f32 %v126, %v203
    %v205 = vpop.f32.mrf.mxu0
    %206 = vdwg.mxu0
    %v207 = vld [vmem:[%s4] sm:$0x1]
    %v209 = vlaneseq
    %v210 = vshrl.u32 %v209, 7
    %v211 = vsub.s32 0, %v210
    %v212 = vrot.slane %v207, %v211
    %v214 = vadd.f32 %v204, %v212
    %v215 = vmax.f32 %v214, 0.0
    %v216 = vld [vmem:[#allocation3] sm:$0xff]
    %v217 = vld [vmem:[#allocation3 + $0x8] sm:$0xff]
    %v218 = vld [vmem:[#allocation3 + $0x10] sm:$0xff]
    %v219 = vld [vmem:[#allocation3 + $0x18] sm:$0xff]
    %v220 = vld [vmem:[#allocation3 + $0x20] sm:$0xff]
    %v221 = vld [vmem:[#allocation3 + $0x28] sm:$0xff]
    %v222 = vld [vmem:[#allocation3 + $0x30] sm:$0xff]
    %v223 = vld [vmem:[#allocation3 + $0x38] sm:$0xff]
    %v224 = vld [vmem:[#allocation3 + $0x40] sm:$0xff]
    %v225 = vld [vmem:[#allocation3 + $0x48] sm:$0xff]
    %v226 = vld [vmem:[#allocation3 + $0x50] sm:$0xff]
    %v227 = vld [vmem:[#allocation3 + $0x58] sm:$0xff]
    %v228 = vld [vmem:[#allocation3 + $0x60] sm:$0xff]
    %v229 = vld [vmem:[#allocation3 + $0x68] sm:$0xff]
    %v230 = vld [vmem:[#allocation3 + $0x70] sm:$0xff]
    %v231 = vld [vmem:[#allocation3 + $0x78] sm:$0xff]
    %v232 = vld [vmem:[%s6] sm:$0x1]
    %v234 = vlaneseq
    %v235 = vshrl.u32 %v234, 7
    %v236 = vsub.s32 0, %v235
    %v237 = vrot.slane %v232, %v236
    %239 = vmatprep.subr.mxu0 0.0
    %240 = vmatpush1.msra.mxu0 %v231
    %241 = vmatprep.subr.mxu0 0.0
    %242 = vmatpush1.msra.mxu0 %v230
    %243 = vmatprep.subr.mxu0 0.0
    %244 = vmatpush1.msra.mxu0 %v229
    %245 = vmatprep.subr.mxu0 0.0
    %246 = vmatpush1.msra.mxu0 %v228
    %247 = vmatprep.subr.mxu0 0.0
    %248 = vmatpush1.msra.mxu0 %v227
    %249 = vmatprep.subr.mxu0 0.0
    %250 = vmatpush1.msra.mxu0 %v226
    %251 = vmatprep.subr.mxu0 0.0
    %252 = vmatpush1.msra.mxu0 %v225
    %253 = vmatprep.subr.mxu0 0.0
    %254 = vmatpush1.msra.mxu0 %v224
    %255 = vmatprep.subr.mxu0 0.0
    %256 = vmatpush1.msra.mxu0 %v223
    %257 = vmatprep.subr.mxu0 0.0
    %258 = vmatpush1.msra.mxu0 %v222
    %259 = vmatprep.subr.mxu0 0.0
    %260 = vmatpush1.msra.mxu0 %v221
    %261 = vmatprep.subr.mxu0 0.0
    %262 = vmatpush1.msra.mxu0 %v220
    %263 = vmatprep.subr.mxu0 0.0
    %264 = vmatpush1.msra.mxu0 %v219
    %265 = vmatprep.subr.mxu0 0.0
    %266 = vmatpush1.msra.mxu0 %v218
    %267 = vmatprep.subr.mxu0 0.0
    %268 = vmatpush1.msra.mxu0 %v217
    %269 = vmatprep.subr.mxu0 0.0
    %270 = vmatpush1.msra.mxu0 %v216
    %271 = vmatprep.subr.mxu0 0.0
    %272 = vmatpush2.msra.mxu0 0.0
    %273 = vmatprep.subr.mxu0 0.0
    %274 = vmatpush2.msra.mxu0 0.0
    %275 = vmatprep.subr.mxu0 0.0
    %276 = vmatpush2.msra.mxu0 0.0
    %277 = vmatprep.subr.mxu0 0.0
    %278 = vmatpush2.msra.mxu0 0.0
    %279 = vmatprep.subr.mxu0 0.0
    %280 = vmatpush2.msra.mxu0 0.0
    %281 = vmatprep.subr.mxu0 0.0
    %282 = vmatpush2.msra.mxu0 0.0
    %283 = vmatprep.subr.mxu0 0.0
    %284 = vmatpush2.msra.mxu0 0.0
    %285 = vmatprep.subr.mxu0 0.0
    %286 = vmatpush2.msra.mxu0 0.0
    %287 = vmatprep.subr.mxu0 0.0
    %288 = vmatpush2.msra.mxu0 0.0
    %289 = vmatprep.subr.mxu0 0.0
    %290 = vmatpush2.msra.mxu0 0.0
    %291 = vmatprep.subr.mxu0 0.0
    %292 = vmatpush2.msra.mxu0 0.0
    %293 = vmatprep.subr.mxu0 0.0
    %294 = vmatpush2.msra.mxu0 0.0
    %295 = vmatprep.subr.mxu0 0.0
    %296 = vmatpush2.msra.mxu0 0.0
    %297 = vmatprep.subr.mxu0 0.0
    %298 = vmatpush2.msra.mxu0 0.0
    %299 = vmatprep.subr.mxu0 0.0
    %300 = vmatpush2.msra.mxu0 0.0
    %301 = vmatprep.subr.mxu0 0.0
    %302 = vmatpush2.msra.mxu0 0.0
    %303 = vmatprep.mubr.f32.mxu0 0.0
    %304 = vmatmul.mubr.f32.gmra.mxu0 %v215
    %v305 = vpop.f32.mrf.mxu0
    %v306 = vadd.f32 %v237, %v305
    %v307 = vpop.f32.mrf.mxu0
    %308 = vdwg.mxu0
    %v309 = vmax.f32 %v306, 0.0
    %v310 = vld [vmem:[%s7] sm:$0x1]
    %v312 = vlaneseq
    %v313 = vshrl.u32 %v312, 7
    %v314 = vsub.s32 0, %v313
    %v315 = vrot.slane %v310, %v314
    %v317 = vmul.f32 %v309, %v315
    %318 = vadd.xlane.f32.xlu0 %v317
    %v319 = vpop.xlane.xlu0 %318
    %s320 = sld [smem:[#allocation2]]
    %v321 = vstv %s320
    %v322 = vadd.f32 %v319, %v321
    %323 = vst.msk [vmem:[%s9] sm:$0xff] %vm51, %v322
    // Predicated region
    $region42: #{tpu_custom_call.1} parent=1 // pred_check
      _
    $region43: #{tpu_custom_call.1} parent=1 // pred_check_branch
      %325 = sbr.rel (0) target = $region45
    $region44: #{tpu_custom_call.1} parent=1 // pred_region
      _
    $region45: #{tpu_custom_call.1} parent=1 // pred_fallthru
      _
    // Predicated region
    $region46: #{tpu_custom_call.1} parent=1 // pred_check
      _
    $region47: #{tpu_custom_call.1} parent=1 // pred_check_branch
      %327 = sbr.rel (0) target = $region49
    $region48: #{tpu_custom_call.1} parent=1 // pred_region
      _
    $region49: #{tpu_custom_call.1} parent=1 // pred_fallthru
      _
    %328 = vsyncpa [#allocation4], 1

</llo_original>
